<compile_context>
chip_gen: v7x
topology: tpu7x:2x2x1
jax: 0.10.0
libtpu: 0.0.40
codegen_flags: <defaults>
</compile_context>

<pallas_src>
import jax
import jax.numpy as jnp
from jax.experimental import pallas as pl
from jax.experimental.pallas import tpu as pltpu


_VMEM_BUDGET = 10 * 1024 * 1024   # per-call working-set target (double-buffered blocks)
_MAX_ROW_BLOCK = 512              # caps the (2*TR, TR) one-hot matrix at ~2 MiB f32


# --------------------------------------------------------------------------- #
# Kernels
# --------------------------------------------------------------------------- #

def _upsample_kernel(uh_ref, uw_ref, x_ref, o_ref):
    # x_ref: (TR, W) slab of flattened rows  ->  o_ref: (2*TR, 2*W)
    # out[2r+a, 2w+b] = x[r, w]; expressed as two one-hot matmuls whose
    # matrices are hoisted to the wrapper (constant index_map, VMEM-resident).
    x = x_ref[...]
    y = jnp.dot(uh_ref[...], x, preferred_element_type=jnp.float32).astype(x.dtype)
    z = jnp.dot(y, uw_ref[...], preferred_element_type=jnp.float32)
    o_ref[...] = z.astype(o_ref.dtype)


def _avgpool_kernel(ph_ref, pw_ref, x_ref, o_ref):
    # x_ref: (2*TP, W)  ->  o_ref: (TP, W//2); 2x2 mean pool, stride 2.
    # The 0.25 is folded into ph/pw (0.5 each) -> no epilogue multiply.
    x = x_ref[...]
    y = jnp.dot(ph_ref[...], x, preferred_element_type=jnp.float32).astype(x.dtype)
    z = jnp.dot(y, pw_ref[...], preferred_element_type=jnp.float32)
    o_ref[...] = z.astype(o_ref.dtype)


# --------------------------------------------------------------------------- #
# Block-size selection
# --------------------------------------------------------------------------- #

def _pick_row_block(total_rows, max_rows, prefer_split=True):
    """Largest multiple-of-8 divisor of total_rows that is <= max_rows (and, if
    possible, <= total_rows // 2 so the grid stays >= 2 and can shard across
    TensorCores).  Falls back to the full extent for tiny / awkward sizes,
    which is always legal because a block equal to the full dim is allowed."""
    cap = min(max_rows, total_rows)
    if prefer_split:
        cap = min(cap, total_rows // 2)
    best = 0
    d = 8
    while d <= cap:
        if total_rows % d == 0:
            best = d
        d += 8
    return best if best else total_rows


# --------------------------------------------------------------------------- #
# Wrappers
# --------------------------------------------------------------------------- #

def upsample_nearest_2x(x):
    """NCHW nearest-neighbour 2x upsample (== F.upsample(x, scale_factor=2))."""
    N, C, H, W = x.shape
    dt = x.dtype
    sz = jnp.dtype(dt).itemsize
    R = N * C * H
    x2 = x.reshape(R, W)

    # Working set (double buffered): in 2*TR*W + out 2*(2TR*2W) + uh 2*(2TR*TR).
    cap = _MAX_ROW_BLOCK
    while cap > 8 and sz * (10 * cap * W + 4 * cap * cap) > _VMEM_BUDGET:
        cap //= 2
    TR = _pick_row_block(R, cap)
    nblk = R // TR

    # Hoisted one-hot replication matrices (input dtype; exact for 0/1).
    uh = (jnp.arange(2 * TR)[:, None] // 2 == jnp.arange(TR)[None, :]).astype(dt)  # (2TR, TR)
    uw = (jnp.arange(W)[:, None] == jnp.arange(2 * W)[None, :] // 2).astype(dt)    # (W, 2W)

    flops = nblk * (2 * (2 * TR) * TR * W + 2 * (2 * TR) * W * (2 * W))
    bytes_accessed = sz * (R * W + 4 * R * W + 2 * TR * TR + 2 * W * W)

    out2 = pl.pallas_call(
        _upsample_kernel,
        out_shape=jax.ShapeDtypeStruct((2 * R, 2 * W), dt),
        grid=(nblk,),
        in_specs=[
            pl.BlockSpec((2 * TR, TR), lambda i: (0, 0)),     # uh, grid-invariant
            pl.BlockSpec((W, 2 * W), lambda i: (0, 0)),       # uw, grid-invariant
            pl.BlockSpec((TR, W), lambda i: (i, 0)),          # x slab
        ],
        out_specs=pl.BlockSpec((2 * TR, 2 * W), lambda i: (i, 0)),
        compiler_params=pltpu.CompilerParams(dimension_semantics=("parallel",)),
        cost_estimate=pl.CostEstimate(flops=flops, transcendentals=0,
                                      bytes_accessed=bytes_accessed),
    )(uh, uw, x2)
    return out2.reshape(N, C, 2 * H, 2 * W)


def avg_pool_2x2(x):
    """NCHW 2x2 average pool, stride 2 (== F.avg_pool2d(x, 2, 2))."""
    N, C, H, W = x.shape
    dt = x.dtype
    sz = jnp.dtype(dt).itemsize
    hH, hW = H // 2, W // 2
    # kernel=2, stride=2 drops a trailing odd row / column (matches PyTorch).
    x = x[:, :, : 2 * hH, : 2 * hW]
    Rh = N * C * hH            # pooled (output) rows
    Win = 2 * hW
    x2 = x.reshape(2 * Rh, Win)

    # Working set (double buffered): in 2*(2TP*W) + out 2*(TP*W/2) + ph 2*(TP*2TP).
    cap = _MAX_ROW_BLOCK
    while cap > 8 and sz * (5 * cap * Win + 4 * cap * cap) > _VMEM_BUDGET:
        cap //= 2
    TP = _pick_row_block(Rh, cap)
    nblk = Rh // TP

    # Hoisted pooling matrices with the 0.25 folded in (0.5 * 0.5).
    ph = jnp.where(jnp.arange(2 * TP)[None, :] // 2 == jnp.arange(TP)[:, None],
                   0.5, 0.0).astype(dt)                                            # (TP, 2TP)
    pw = jnp.where(jnp.arange(Win)[:, None] // 2 == jnp.arange(hW)[None, :],
                   0.5, 0.0).astype(dt)                                            # (Win, hW)

    flops = nblk * (2 * TP * (2 * TP) * Win + 2 * TP * Win * hW)
    bytes_accessed = sz * (2 * Rh * Win + Rh * hW + 2 * TP * TP + Win * hW)

    out2 = pl.pallas_call(
        _avgpool_kernel,
        out_shape=jax.ShapeDtypeStruct((Rh, hW), dt),
        grid=(nblk,),
        in_specs=[
            pl.BlockSpec((TP, 2 * TP), lambda i: (0, 0)),     # ph, grid-invariant
            pl.BlockSpec((Win, hW), lambda i: (0, 0)),        # pw, grid-invariant
            pl.BlockSpec((2 * TP, Win), lambda i: (i, 0)),    # x slab
        ],
        out_specs=pl.BlockSpec((TP, hW), lambda i: (i, 0)),
        compiler_params=pltpu.CompilerParams(dimension_semantics=("parallel",)),
        cost_estimate=pl.CostEstimate(flops=flops, transcendentals=0,
                                      bytes_accessed=bytes_accessed),
    )(ph, pw, x2)
    return out2.reshape(N, C, hH, hW)


def scale_forward(x, type_):
    """Pallas equivalent of Scale(type).forward(x), x in NCHW."""
    if type_ == 'G':
        return upsample_nearest_2x(x)
    else:
        return avg_pool_2x2(x)


if __name__ == "__main__":
    key = jax.random.PRNGKey(0)
    x = jax.random.normal(key, (2, 4, 16, 16), dtype=jnp.float32)

    # --- generator branch: 2x nearest upsample -------------------------------
    y_g = jax.block_until_ready(scale_forward(x, 'G'))
    ref_g = jnp.repeat(jnp.repeat(x, 2, axis=2), 2, axis=3)
    assert y_g.shape == (2, 4, 32, 32)
    assert jnp.allclose(y_g, ref_g, atol=1e-6), "upsample mismatch"

    # --- discriminator branch: 2x2 average pool ------------------------------
    y_d = jax.block_until_ready(scale_forward(x, 'D'))
    N, C, H, W = x.shape
    ref_d = x.reshape(N, C, H // 2, 2, W // 2, 2).mean(axis=(3, 5))
    assert y_d.shape == (2, 4, 8, 8)
    assert jnp.allclose(y_d, ref_d, atol=1e-5), "avg_pool mismatch"

    print("KERNEL_OK")
</pallas_src>

<mosaic_0001>
module attributes {stable_mosaic.version = 11 : i64} {
  func.func @_upsample_kernel(%arg0: i32, %arg1: memref<128x64xf32, #tpu.memory_space<vmem>>, %arg2: memref<16x32xf32, #tpu.memory_space<vmem>>, %arg3: memref<64x16xf32, #tpu.memory_space<vmem>>, %arg4: memref<128x32xf32, #tpu.memory_space<vmem>>) attributes {dimension_semantics = [#tpu.dimension_semantics<parallel>], iteration_bounds = array<i64: 2>, scalar_prefetch = 0 : i64, scratch_operands = 0 : i64, tpu.core_type = #tpu.core_type<tc>, window_params = [{pipeline_mode = #tpu.pipeline_mode<synchronous>, transform_indices = @transform_0, window_bounds = array<i64: 128, 64>}, {pipeline_mode = #tpu.pipeline_mode<synchronous>, transform_indices = @transform_1, window_bounds = array<i64: 16, 32>}, {transform_indices = @transform_2, window_bounds = array<i64: 64, 16>}, {transform_indices = @transform_3, window_bounds = array<i64: 128, 32>}]} {
    %c0 = arith.constant 0 : index
    %c0_0 = arith.constant 0 : index
    %0 = vector.load %arg3[%c0, %c0_0] : memref<64x16xf32, #tpu.memory_space<vmem>>, vector<64x16xf32>
    %c0_1 = arith.constant 0 : index
    %c0_2 = arith.constant 0 : index
    %1 = vector.load %arg1[%c0_1, %c0_2] : memref<128x64xf32, #tpu.memory_space<vmem>>, vector<128x64xf32>
    %cst = arith.constant dense<0.000000e+00> : vector<128x16xf32>
    %2 = tpu.matmul %1, %0, %cst {dimension_numbers = #tpu.dot_dimension_numbers<[1], [0], [0], [1], [0, 0, 1, 1], [], []>} : vector<128x64xf32>, vector<64x16xf32>, vector<128x16xf32> -> vector<128x16xf32>
    %c0_3 = arith.constant 0 : index
    %c0_4 = arith.constant 0 : index
    %3 = vector.load %arg2[%c0_3, %c0_4] : memref<16x32xf32, #tpu.memory_space<vmem>>, vector<16x32xf32>
    %cst_5 = arith.constant dense<0.000000e+00> : vector<128x32xf32>
    %4 = tpu.matmul %2, %3, %cst_5 {dimension_numbers = #tpu.dot_dimension_numbers<[1], [0], [0], [1], [0, 0, 1, 1], [], []>} : vector<128x16xf32>, vector<16x32xf32>, vector<128x32xf32> -> vector<128x32xf32>
    %c0_6 = arith.constant 0 : index
    %c0_7 = arith.constant 0 : index
    %5 = vector.load %arg4[%c0_6, %c0_7] : memref<128x32xf32, #tpu.memory_space<vmem>>, vector<128x32xf32>
    tpu.vector_store %arg4[%c0_6, %c0_7], %4 {strides = array<i32>} : memref<128x32xf32, #tpu.memory_space<vmem>>, vector<128x32xf32>,
    return
  }
  func.func @transform_0(%arg0: i32) -> (i32, i32) {
    %c0_i32 = arith.constant 0 : i32
    %c0_i32_0 = arith.constant 0 : i32
    %c0_i32_1 = arith.constant 0 : i32
    return %c0_i32, %c0_i32_0 : i32, i32
  }
  func.func @transform_1(%arg0: i32) -> (i32, i32) {
    %c0_i32 = arith.constant 0 : i32
    %c0_i32_0 = arith.constant 0 : i32
    %c0_i32_1 = arith.constant 0 : i32
    return %c0_i32, %c0_i32_0 : i32, i32
  }
  func.func @transform_2(%arg0: i32) -> (i32, i32) {
    %c0_i32 = arith.constant 0 : i32
    %c0_i32_0 = arith.constant 0 : i32
    return %arg0, %c0_i32 : i32, i32
  }
  func.func @transform_3(%arg0: i32) -> (i32, i32) {
    %c0_i32 = arith.constant 0 : i32
    %c0_i32_0 = arith.constant 0 : i32
    return %arg0, %c0_i32 : i32, i32
  }
}

</mosaic_0001>

<llo_original>
// kernel: tpu_custom_call.1
$region0: #{tpu_custom_call.1}
  #allocation0 [shape = 'u32[]', space=smem, size = 0x4, offset = 0x4, fixed_abs, tag = 'smem constant byte address 0x4 - core index']
  #allocation1 [shape = 'u32[144,128]{1,0:T(1,128)}', space=vmem, size = 0x12000, scoped, tag = 'internal scratch']
  %s0 = inlined_call_operand.vmem [shape: f32[128,64], index: 0, kind: input, shape index: {}]
  %s1 = inlined_call_operand.vmem [shape: f32[16,32], index: 1, kind: input, shape index: {}]
  %s2 = inlined_call_operand.vmem [shape: f32[128,16], index: 2, kind: input, shape index: {}]
  %s3 = inlined_call_operand.vmem [shape: f32[256,32], index: 3, kind: output, shape index: {}]
  %s4 = sld [smem:[#allocation0]]
  $region45: #{tpu_custom_call.1} parent=0
    _
  %s6 = ssub.s32 1, %s4
  %s7 = scalar_select 0, %s6, %s4
  loop: start=0, step=1, limit=4
  $region2: #{tpu_custom_call.1} parent=0 // loop_pre_header
    _
  $region3: #{tpu_custom_call.1} parent=0 // loop_header
    %s9 = sphi 0, %s13
    %p10 = scmp.ge.s32.totalorder %s9, 4
    %s17 = sphi 0, %s17
    %s19 = sphi 0, %s17
    %s20 = sphi 0, %s19
    %s34 = sphi 0, %s20
    %s38 = sphi 0, %s38
    %s40 = sphi 0, %s38
    %s41 = sphi 0, %s40
    %s55 = sphi 0, %s41
    %s61 = sphi 0, %s63
    %s64 = sphi 0, %s61
    %s65 = sphi 0, %s64
    %s81 = sphi 0, %s65
    %s87 = sphi 0, %s89
    %s90 = sphi 0, %s87
    %s91 = sphi 0, %s90
    %s107 = sphi 0, %s91
  $region4: #{tpu_custom_call.1} parent=0 // loop_header_branch
    %12 = sbr.rel (%p10) target = $region8
  $region5: #{tpu_custom_call.1} parent=0 // loop_body
    %s14 = ssub.s32 %s9, 1
    %s15 = ssub.s32 %s9, 2
    %s16 = sadd.s32 %s9, 1
    %s18 = sadd.s32 %s17, 1
    %p21 = scmp.eq.s32.totalorder %s9, 1
    %p22 = scmp.ne.s32.totalorder %s17, %s19
    %p23 = scmp.eq.s32.totalorder %s9, 0
    %p24 = por %p22, %p23
    %p25 = scmp.ne.s32.totalorder %s17, %s19
    %p26 = scmp.eq.s32.totalorder %s14, 1
    %p27 = por %p25, %p26
    %p28 = scmp.ne.s32.totalorder %s19, %s20
    %p29 = scmp.eq.s32.totalorder %s14, 0
    %p30 = por %p28, %p29
    %p31 = scmp.ne.s32.totalorder %s19, %s20
    %p32 = scmp.eq.s32.totalorder %s15, 1
    %p33 = por %p31, %p32
    %p35 = scmp.ne.s32.totalorder %s20, %s34
    %p36 = scmp.eq.s32.totalorder %s15, 0
    %p37 = por %p35, %p36
    %s39 = sadd.s32 %s38, 1
    %p42 = scmp.eq.s32.totalorder %s9, 1
    %p43 = scmp.ne.s32.totalorder %s38, %s40
    %p44 = scmp.eq.s32.totalorder %s9, 0
    %p45 = por %p43, %p44
    %p46 = scmp.ne.s32.totalorder %s38, %s40
    %p47 = scmp.eq.s32.totalorder %s14, 1
    %p48 = por %p46, %p47
    %p49 = scmp.ne.s32.totalorder %s40, %s41
    %p50 = scmp.eq.s32.totalorder %s14, 0
    %p51 = por %p49, %p50
    %p52 = scmp.ne.s32.totalorder %s40, %s41
    %p53 = scmp.eq.s32.totalorder %s15, 1
    %p54 = por %p52, %p53
    %p56 = scmp.ne.s32.totalorder %s41, %s55
    %p57 = scmp.eq.s32.totalorder %s15, 0
    %p58 = por %p56, %p57
    %s59 = ssub.s32 %s9, %s16
    %p60 = scmp.eq.s32.totalorder %s59, 0
    %s62 = sadd.s32 %s61, 1
    %s63 = scalar_select %p60, %s61, %s62
    %p66 = pneg %p60
    %p67 = scmp.eq.s32.totalorder %s9, 1
    %p68 = por %p66, %p67
    %p69 = scmp.ne.s32.totalorder %s61, %s64
    %p70 = scmp.eq.s32.totalorder %s9, 0
    %p71 = por %p69, %p70
    %p72 = scmp.ne.s32.totalorder %s61, %s64
    %p73 = scmp.eq.s32.totalorder %s14, 1
    %p74 = por %p72, %p73
    %p75 = scmp.ne.s32.totalorder %s64, %s65
    %p76 = scmp.eq.s32.totalorder %s14, 0
    %p77 = por %p75, %p76
    %p78 = scmp.ne.s32.totalorder %s64, %s65
    %p79 = scmp.eq.s32.totalorder %s15, 1
    %p80 = por %p78, %p79
    %p82 = scmp.ne.s32.totalorder %s65, %s81
    %p83 = scmp.eq.s32.totalorder %s15, 0
    %p84 = por %p82, %p83
    %s85 = ssub.s32 %s9, %s16
    %p86 = scmp.eq.s32.totalorder %s85, 0
    %s88 = sadd.s32 %s87, 1
    %s89 = scalar_select %p86, %s87, %s88
    %p92 = pneg %p86
    %p93 = scmp.eq.s32.totalorder %s9, 1
    %p94 = por %p92, %p93
    %p95 = scmp.ne.s32.totalorder %s87, %s90
    %p96 = scmp.eq.s32.totalorder %s9, 0
    %p97 = por %p95, %p96
    %p98 = scmp.ne.s32.totalorder %s87, %s90
    %p99 = scmp.eq.s32.totalorder %s14, 1
    %p100 = por %p98, %p99
    %p101 = scmp.ne.s32.totalorder %s90, %s91
    %p102 = scmp.eq.s32.totalorder %s14, 0
    %p103 = por %p101, %p102
    %p104 = scmp.ne.s32.totalorder %s90, %s91
    %p105 = scmp.eq.s32.totalorder %s15, 1
    %p106 = por %p104, %p105
    %p108 = scmp.ne.s32.totalorder %s91, %s107
    %p109 = scmp.eq.s32.totalorder %s15, 0
    %p110 = por %p108, %p109
    %p111 = scmp.le.s32.totalorder 1, %s9
    %p112 = scmp.lt.s32.totalorder %s9, 3
    %p113 = pnand %p111, %p112
    %p114 = pneg %p113
    // Predicated region
    $region9: #{tpu_custom_call.1} parent=5 // pred_check
      _
    $region10: #{tpu_custom_call.1} parent=5 // pred_check_branch
      %116 = sbr.rel (%p113) target = $region12
    $region11: #{tpu_custom_call.1} parent=5 // pred_region
      %s117 = ssub.s32 %s9, 1
      // Predicated region
      $region13: #{tpu_custom_call.1} parent=11 // pred_check
        %p118 = pneg %p30
      $region14: #{tpu_custom_call.1} parent=11 // pred_check_branch
        %120 = sbr.rel (%p118) target = $region16
      $region15: #{tpu_custom_call.1} parent=11 // pred_region
        _
      $region16: #{tpu_custom_call.1} parent=11 // pred_fallthru
        _
      // Predicated region
      $region17: #{tpu_custom_call.1} parent=11 // pred_check
        %p121 = pneg %p51
      $region18: #{tpu_custom_call.1} parent=11 // pred_check_branch
        %123 = sbr.rel (%p121) target = $region20
      $region19: #{tpu_custom_call.1} parent=11 // pred_region
        _
      $region20: #{tpu_custom_call.1} parent=11 // pred_fallthru
        _
    $region12: #{tpu_custom_call.1} parent=5 // pred_fallthru
      _
    %p124 = scmp.lt.s32.totalorder %s9, 2
    // Predicated region
    $region21: #{tpu_custom_call.1} parent=5 // pred_check
      %p125 = pneg %p124
    $region22: #{tpu_custom_call.1} parent=5 // pred_check_branch
      %127 = sbr.rel (%p125) target = $region24
    $region23: #{tpu_custom_call.1} parent=5 // pred_region
      // Predicated region
      $region25: #{tpu_custom_call.1} parent=23 // pred_check
        %p128 = pneg %p71
      $region26: #{tpu_custom_call.1} parent=23 // pred_check_branch
        %130 = sbr.rel (%p128) target = $region28
      $region27: #{tpu_custom_call.1} parent=23 // pred_region
        %s131 = smul.u32 8, %s9
        %p132 = scmp.lt.s32.totalorder %s131, 15
        %s133 = scalar_select %p132, %s131, 15
        %s134 = smul.addr %s133, 8
        %s135 = scalar_lea.vmem %s2, %s134
        %s136 = smul.u32 8, %s9
      $region28: #{tpu_custom_call.1} parent=23 // pred_fallthru
        _
    $region24: #{tpu_custom_call.1} parent=5 // pred_fallthru
      _
    %p137 = scmp.le.s32.totalorder 1, %s9
    %p138 = scmp.lt.s32.totalorder %s9, 3
    %p139 = pnand %p137, %p138
    %p140 = pneg %p139
    // Predicated region
    $region29: #{tpu_custom_call.1} parent=5 // pred_check
      _
    $region30: #{tpu_custom_call.1} parent=5 // pred_check_branch
      %142 = sbr.rel (%p139) target = $region32
    $region31: #{tpu_custom_call.1} parent=5 // pred_region
      %s143 = ssub.s32 %s9, 1
      %p144 = pneg %p30
      %p145 = pneg %p27
      %p146 = pneg %p51
      %p147 = pneg %p48
      %s148 = smul.u32 8, %s14
      %p149 = scmp.lt.s32.totalorder %s148, 15
      %s150 = scalar_select %p149, %s148, 15
      %s151 = smul.addr %s150, 8
      %s152 = scalar_lea.vmem %s2, %s151
      %p153 = pneg %p77
      %p154 = pneg %p74
      %p155 = pneg %p103
      %p156 = pneg %p100
      %s157 = smul.u32 16, %s14
      %p158 = scmp.lt.s32.totalorder %s157, 31
      %s159 = scalar_select %p158, %s157, 31
      %s160 = smul.addr %s159, 8
      %s161 = scalar_lea.vmem %s3, %s160
      %s162 = smul.u32 8, %s14
      %p163 = scmp.lt.s32.totalorder %s162, 15
      %s164 = scalar_select %p163, %s162, 15
      %s165 = smul.addr %s164, 8
      %s166 = scalar_lea.vmem %s2, %s165
      %s167 = smul.u32 8, %s14
      %s168 = smul.u32 16, %s14
      %p169 = scmp.lt.s32.totalorder %s168, 31
      %s170 = scalar_select %p169, %s168, 31
      %s171 = smul.addr %s170, 8
      %s172 = scalar_lea.vmem %s3, %s171
      %s173 = smul.u32 16, %s14
      %v174 = vld [vmem:[%s166] sm:$0xff]
      %v175 = vld [vmem:[%s166 + $0x8] sm:$0xff]
      %v176 = vld [vmem:[%s166 + $0x10] sm:$0xff]
      %v177 = vld [vmem:[%s166 + $0x18] sm:$0xff]
      %v178 = vld [vmem:[%s166 + $0x20] sm:$0xff]
      %v179 = vld [vmem:[%s166 + $0x28] sm:$0xff]
      %v180 = vld [vmem:[%s166 + $0x30] sm:$0xff]
      %v181 = vld [vmem:[%s166 + $0x38] sm:$0xff]
      %v182 = vld [vmem:[%s0] sm:$0xff]
      %v183 = vld [vmem:[%s0 + $0x8] sm:$0xff]
      %v184 = vld [vmem:[%s0 + $0x10] sm:$0xff]
      %v185 = vld [vmem:[%s0 + $0x18] sm:$0xff]
      %v186 = vld [vmem:[%s0 + $0x20] sm:$0xff]
      %v187 = vld [vmem:[%s0 + $0x28] sm:$0xff]
      %v188 = vld [vmem:[%s0 + $0x30] sm:$0xff]
      %v189 = vld [vmem:[%s0 + $0x38] sm:$0xff]
      %v190 = vld [vmem:[%s0 + $0x40] sm:$0xff]
      %v191 = vld [vmem:[%s0 + $0x48] sm:$0xff]
      %v192 = vld [vmem:[%s0 + $0x50] sm:$0xff]
      %v193 = vld [vmem:[%s0 + $0x58] sm:$0xff]
      %v194 = vld [vmem:[%s0 + $0x60] sm:$0xff]
      %v195 = vld [vmem:[%s0 + $0x68] sm:$0xff]
      %v196 = vld [vmem:[%s0 + $0x70] sm:$0xff]
      %v197 = vld [vmem:[%s0 + $0x78] sm:$0xff]
      %vm198 = vcmask 523264
      %v200 = vsel %vm198, %v182, 0
      %v203 = vsel %vm198, %v183, 0
      %v206 = vsel %vm198, %v184, 0
      %v209 = vsel %vm198, %v185, 0
      %v212 = vsel %vm198, %v186, 0
      %v215 = vsel %vm198, %v187, 0
      %v218 = vsel %vm198, %v188, 0
      %v221 = vsel %vm198, %v189, 0
      %v224 = vsel %vm198, %v190, 0
      %v227 = vsel %vm198, %v191, 0
      %v230 = vsel %vm198, %v192, 0
      %v233 = vsel %vm198, %v193, 0
      %v236 = vsel %vm198, %v194, 0
      %v239 = vsel %vm198, %v195, 0
      %v242 = vsel %vm198, %v196, 0
      %v245 = vsel %vm198, %v197, 0
      %247 = vmatprep.subr.mxu0 0.0
      %248 = vmatpush1.msra.mxu0 %v174
      %249 = vmatprep.subr.mxu0 0.0
      %250 = vmatpush1.msra.mxu0 %v175
      %251 = vmatprep.subr.mxu0 0.0
      %252 = vmatpush1.msra.mxu0 %v176
      %253 = vmatprep.subr.mxu0 0.0
      %254 = vmatpush1.msra.mxu0 %v177
      %255 = vmatprep.subr.mxu0 0.0
      %256 = vmatpush1.msra.mxu0 %v178
      %257 = vmatprep.subr.mxu0 0.0
      %258 = vmatpush1.msra.mxu0 %v179
      %259 = vmatprep.subr.mxu0 0.0
      %260 = vmatpush1.msra.mxu0 %v180
      %261 = vmatprep.subr.mxu0 0.0
      %262 = vmatpush1.msra.mxu0 %v181
      %263 = vmatprep.subr.mxu0 0.0
      %264 = vmatpush1.msra.mxu0 0.0
      %265 = vmatprep.subr.mxu0 0.0
      %266 = vmatpush1.msra.mxu0 0.0
      %267 = vmatprep.subr.mxu0 0.0
      %268 = vmatpush1.msra.mxu0 0.0
      %269 = vmatprep.subr.mxu0 0.0
      %270 = vmatpush1.msra.mxu0 0.0
      %271 = vmatprep.subr.mxu0 0.0
      %272 = vmatpush1.msra.mxu0 0.0
      %273 = vmatprep.subr.mxu0 0.0
      %274 = vmatpush1.msra.mxu0 0.0
      %275 = vmatprep.subr.mxu0 0.0
      %276 = vmatpush1.msra.mxu0 0.0
      %277 = vmatprep.subr.mxu0 0.0
      %278 = vmatpush1.msra.mxu0 0.0
      %279 = vmatprep.subr.mxu0 0.0
      %280 = vmatpush1.msra.mxu0 0.0
      %281 = vmatprep.subr.mxu0 0.0
      %282 = vmatpush1.msra.mxu0 0.0
      %283 = vmatprep.subr.mxu0 0.0
      %284 = vmatpush1.msra.mxu0 0.0
      %285 = vmatprep.subr.mxu0 0.0
      %286 = vmatpush1.msra.mxu0 0.0
      %287 = vmatprep.subr.mxu0 0.0
      %288 = vmatpush1.msra.mxu0 0.0
      %289 = vmatprep.subr.mxu0 0.0
      %290 = vmatpush1.msra.mxu0 0.0
      %291 = vmatprep.subr.mxu0 0.0
      %292 = vmatpush1.msra.mxu0 0.0
      %293 = vmatprep.subr.mxu0 0.0
      %294 = vmatpush1.msra.mxu0 0.0
      %295 = vmatprep.subr.mxu0 0.0
      %296 = vmatpush1.msra.mxu0 0.0
      %297 = vmatprep.subr.mxu0 0.0
      %298 = vmatpush1.msra.mxu0 0.0
      %299 = vmatprep.subr.mxu0 0.0
      %300 = vmatpush1.msra.mxu0 0.0
      %301 = vmatprep.subr.mxu0 0.0
      %302 = vmatpush1.msra.mxu0 0.0
      %303 = vmatprep.subr.mxu0 0.0
      %304 = vmatpush1.msra.mxu0 0.0
      %305 = vmatprep.subr.mxu0 0.0
      %306 = vmatpush1.msra.mxu0 0.0
      %307 = vmatprep.subr.mxu0 0.0
      %308 = vmatpush1.msra.mxu0 0.0
      %309 = vmatprep.subr.mxu0 0.0
      %310 = vmatpush1.msra.mxu0 0.0
      %311 = vmatprep.mubr.f32.mxu0 0.0
      %312 = vmatmul.mubr.f32.gmra.mrb[0].mxu0 %v200
      %v313 = vpop.f32.mrb[0].mxu0
      %v314 = vadd.f32 0.0, %v313
      %v315 = vpop.f32.mrb[0].mxu0
      %316 = vmatprep.mubr.f32.mxu0 0.0
      %317 = vmatmul.mubr.f32.gmra.mrb[0].mxu0 %v203
      %v318 = vpop.f32.mrb[0].mxu0
      %v319 = vadd.f32 0.0, %v318
      %v320 = vpop.f32.mrb[0].mxu0
      %321 = vmatprep.mubr.f32.mxu0 0.0
      %322 = vmatmul.mubr.f32.gmra.mrb[0].mxu0 %v206
      %v323 = vpop.f32.mrb[0].mxu0
      %v324 = vadd.f32 0.0, %v323
      %v325 = vpop.f32.mrb[0].mxu0
      %326 = vmatprep.mubr.f32.mxu0 0.0
      %327 = vmatmul.mubr.f32.gmra.mrb[0].mxu0 %v209
      %v328 = vpop.f32.mrb[0].mxu0
      %v329 = vadd.f32 0.0, %v328
      %v330 = vpop.f32.mrb[0].mxu0
      %331 = vmatprep.mubr.f32.mxu0 0.0
      %332 = vmatmul.mubr.f32.gmra.mrb[0].mxu0 %v212
      %v333 = vpop.f32.mrb[0].mxu0
      %v334 = vadd.f32 0.0, %v333
      %v335 = vpop.f32.mrb[0].mxu0
      %336 = vmatprep.mubr.f32.mxu0 0.0
      %337 = vmatmul.mubr.f32.gmra.mrb[0].mxu0 %v215
      %v338 = vpop.f32.mrb[0].mxu0
      %v339 = vadd.f32 0.0, %v338
      %v340 = vpop.f32.mrb[0].mxu0
      %341 = vmatprep.mubr.f32.mxu0 0.0
      %342 = vmatmul.mubr.f32.gmra.mrb[0].mxu0 %v218
      %v343 = vpop.f32.mrb[0].mxu0
      %v344 = vadd.f32 0.0, %v343
      %v345 = vpop.f32.mrb[0].mxu0
      %346 = vmatprep.mubr.f32.mxu0 0.0
      %347 = vmatmul.mubr.f32.gmra.mrb[0].mxu0 %v221
      %v348 = vpop.f32.mrb[0].mxu0
      %v349 = vadd.f32 0.0, %v348
      %v350 = vpop.f32.mrb[0].mxu0
      %351 = vmatprep.mubr.f32.mxu0 0.0
      %352 = vmatmul.mubr.f32.gmra.mrb[0].mxu0 %v224
      %v353 = vpop.f32.mrb[0].mxu0
      %v354 = vadd.f32 0.0, %v353
      %v355 = vpop.f32.mrb[0].mxu0
      %356 = vmatprep.mubr.f32.mxu0 0.0
      %357 = vmatmul.mubr.f32.gmra.mrb[0].mxu0 %v227
      %v358 = vpop.f32.mrb[0].mxu0
      %v359 = vadd.f32 0.0, %v358
      %v360 = vpop.f32.mrb[0].mxu0
      %361 = vmatprep.mubr.f32.mxu0 0.0
      %362 = vmatmul.mubr.f32.gmra.mrb[0].mxu0 %v230
      %v363 = vpop.f32.mrb[0].mxu0
      %v364 = vadd.f32 0.0, %v363
      %v365 = vpop.f32.mrb[0].mxu0
      %366 = vmatprep.mubr.f32.mxu0 0.0
      %367 = vmatmul.mubr.f32.gmra.mrb[0].mxu0 %v233
      %v368 = vpop.f32.mrb[0].mxu0
      %v369 = vadd.f32 0.0, %v368
      %v370 = vpop.f32.mrb[0].mxu0
      %371 = vmatprep.mubr.f32.mxu0 0.0
      %372 = vmatmul.mubr.f32.gmra.mrb[0].mxu0 %v236
      %v373 = vpop.f32.mrb[0].mxu0
      %v374 = vadd.f32 0.0, %v373
      %v375 = vpop.f32.mrb[0].mxu0
      %376 = vmatprep.mubr.f32.mxu0 0.0
      %377 = vmatmul.mubr.f32.gmra.mrb[0].mxu0 %v239
      %v378 = vpop.f32.mrb[0].mxu0
      %v379 = vadd.f32 0.0, %v378
      %v380 = vpop.f32.mrb[0].mxu0
      %381 = vmatprep.mubr.f32.mxu0 0.0
      %382 = vmatmul.mubr.f32.gmra.mrb[0].mxu0 %v242
      %v383 = vpop.f32.mrb[0].mxu0
      %v384 = vadd.f32 0.0, %v383
      %v385 = vpop.f32.mrb[0].mxu0
      %386 = vmatprep.mubr.f32.mxu0 0.0
      %387 = vmatmul.mubr.f32.gmra.mrb[0].mxu0 %v245
      %v388 = vpop.f32.mrb[0].mxu0
      %v389 = vadd.f32 0.0, %v388
      %v390 = vpop.f32.mrb[0].mxu0
      %391 = vdwg.mxu0
      %v392 = vld [vmem:[%s1] sm:$0xff]
      %v393 = vld [vmem:[%s1 + $0x8] sm:$0xff]
      %vm394 = vcmask 130048
      %v396 = vsel %vm394, %v314, 0
      %v399 = vsel %vm394, %v319, 0
      %v402 = vsel %vm394, %v324, 0
      %v405 = vsel %vm394, %v329, 0
      %v408 = vsel %vm394, %v334, 0
      %v411 = vsel %vm394, %v339, 0
      %v414 = vsel %vm394, %v344, 0
      %v417 = vsel %vm394, %v349, 0
      %v420 = vsel %vm394, %v354, 0
      %v423 = vsel %vm394, %v359, 0
      %v426 = vsel %vm394, %v364, 0
      %v429 = vsel %vm394, %v369, 0
      %v432 = vsel %vm394, %v374, 0
      %v435 = vsel %vm394, %v379, 0
      %v438 = vsel %vm394, %v384, 0
      %v441 = vsel %vm394, %v389, 0
      %443 = vmatprep.subr.mxu0 0.0
      %444 = vmatpush1.msra.mxu0 %v392
      %445 = vmatprep.subr.mxu0 0.0
      %446 = vmatpush1.msra.mxu0 %v393
      %447 = vmatprep.subr.mxu0 0.0
      %448 = vmatpush1.msra.mxu0 0.0
      %449 = vmatprep.subr.mxu0 0.0
      %450 = vmatpush1.msra.mxu0 0.0
      %451 = vmatprep.subr.mxu0 0.0
      %452 = vmatpush1.msra.mxu0 0.0
      %453 = vmatprep.subr.mxu0 0.0
      %454 = vmatpush1.msra.mxu0 0.0
      %455 = vmatprep.subr.mxu0 0.0
      %456 = vmatpush1.msra.mxu0 0.0
      %457 = vmatprep.subr.mxu0 0.0
      %458 = vmatpush1.msra.mxu0 0.0
      %459 = vmatprep.subr.mxu0 0.0
      %460 = vmatpush1.msra.mxu0 0.0
      %461 = vmatprep.subr.mxu0 0.0
      %462 = vmatpush1.msra.mxu0 0.0
      %463 = vmatprep.subr.mxu0 0.0
      %464 = vmatpush1.msra.mxu0 0.0
      %465 = vmatprep.subr.mxu0 0.0
      %466 = vmatpush1.msra.mxu0 0.0
      %467 = vmatprep.subr.mxu0 0.0
      %468 = vmatpush1.msra.mxu0 0.0
      %469 = vmatprep.subr.mxu0 0.0
      %470 = vmatpush1.msra.mxu0 0.0
      %471 = vmatprep.subr.mxu0 0.0
      %472 = vmatpush1.msra.mxu0 0.0
      %473 = vmatprep.subr.mxu0 0.0
      %474 = vmatpush1.msra.mxu0 0.0
      %475 = vmatprep.subr.mxu0 0.0
      %476 = vmatpush1.msra.mxu0 0.0
      %477 = vmatprep.subr.mxu0 0.0
      %478 = vmatpush1.msra.mxu0 0.0
      %479 = vmatprep.subr.mxu0 0.0
      %480 = vmatpush1.msra.mxu0 0.0
      %481 = vmatprep.subr.mxu0 0.0
      %482 = vmatpush1.msra.mxu0 0.0
      %483 = vmatprep.subr.mxu0 0.0
      %484 = vmatpush1.msra.mxu0 0.0
      %485 = vmatprep.subr.mxu0 0.0
      %486 = vmatpush1.msra.mxu0 0.0
      %487 = vmatprep.subr.mxu0 0.0
      %488 = vmatpush1.msra.mxu0 0.0
      %489 = vmatprep.subr.mxu0 0.0
      %490 = vmatpush1.msra.mxu0 0.0
      %491 = vmatprep.subr.mxu0 0.0
      %492 = vmatpush1.msra.mxu0 0.0
      %493 = vmatprep.subr.mxu0 0.0
      %494 = vmatpush1.msra.mxu0 0.0
      %495 = vmatprep.subr.mxu0 0.0
      %496 = vmatpush1.msra.mxu0 0.0
      %497 = vmatprep.subr.mxu0 0.0
      %498 = vmatpush1.msra.mxu0 0.0
      %499 = vmatprep.subr.mxu0 0.0
      %500 = vmatpush1.msra.mxu0 0.0
      %501 = vmatprep.subr.mxu0 0.0
      %502 = vmatpush1.msra.mxu0 0.0
      %503 = vmatprep.subr.mxu0 0.0
      %504 = vmatpush1.msra.mxu0 0.0
      %505 = vmatprep.subr.mxu0 0.0
      %506 = vmatpush1.msra.mxu0 0.0
      %507 = vmatprep.mubr.f32.mxu0 0.0
      %508 = vmatmul.mubr.f32.gmra.mrb[0].mxu0 %v396
      %v509 = vpop.f32.mrb[0].mxu0
      %v510 = vadd.f32 0.0, %v509
      %v511 = vpop.f32.mrb[0].mxu0
      %512 = vmatprep.mubr.f32.mxu0 0.0
      %513 = vmatmul.mubr.f32.gmra.mrb[0].mxu0 %v399
      %v514 = vpop.f32.mrb[0].mxu0
      %v515 = vadd.f32 0.0, %v514
      %v516 = vpop.f32.mrb[0].mxu0
      %517 = vmatprep.mubr.f32.mxu0 0.0
      %518 = vmatmul.mubr.f32.gmra.mrb[0].mxu0 %v402
      %v519 = vpop.f32.mrb[0].mxu0
      %v520 = vadd.f32 0.0, %v519
      %v521 = vpop.f32.mrb[0].mxu0
      %522 = vmatprep.mubr.f32.mxu0 0.0
      %523 = vmatmul.mubr.f32.gmra.mrb[0].mxu0 %v405
      %v524 = vpop.f32.mrb[0].mxu0
      %v525 = vadd.f32 0.0, %v524
      %v526 = vpop.f32.mrb[0].mxu0
      %527 = vmatprep.mubr.f32.mxu0 0.0
      %528 = vmatmul.mubr.f32.gmra.mrb[0].mxu0 %v408
      %v529 = vpop.f32.mrb[0].mxu0
      %v530 = vadd.f32 0.0, %v529
      %v531 = vpop.f32.mrb[0].mxu0
      %532 = vmatprep.mubr.f32.mxu0 0.0
      %533 = vmatmul.mubr.f32.gmra.mrb[0].mxu0 %v411
      %v534 = vpop.f32.mrb[0].mxu0
      %v535 = vadd.f32 0.0, %v534
      %v536 = vpop.f32.mrb[0].mxu0
      %537 = vmatprep.mubr.f32.mxu0 0.0
      %538 = vmatmul.mubr.f32.gmra.mrb[0].mxu0 %v414
      %v539 = vpop.f32.mrb[0].mxu0
      %v540 = vadd.f32 0.0, %v539
      %v541 = vpop.f32.mrb[0].mxu0
      %542 = vmatprep.mubr.f32.mxu0 0.0
      %543 = vmatmul.mubr.f32.gmra.mrb[0].mxu0 %v417
      %v544 = vpop.f32.mrb[0].mxu0
      %v545 = vadd.f32 0.0, %v544
      %v546 = vpop.f32.mrb[0].mxu0
      %547 = vmatprep.mubr.f32.mxu0 0.0
      %548 = vmatmul.mubr.f32.gmra.mrb[0].mxu0 %v420
      %v549 = vpop.f32.mrb[0].mxu0
      %v550 = vadd.f32 0.0, %v549
      %v551 = vpop.f32.mrb[0].mxu0
      %552 = vmatprep.mubr.f32.mxu0 0.0
      %553 = vmatmul.mubr.f32.gmra.mrb[0].mxu0 %v423
      %v554 = vpop.f32.mrb[0].mxu0
      %v555 = vadd.f32 0.0, %v554
      %v556 = vpop.f32.mrb[0].mxu0
      %557 = vmatprep.mubr.f32.mxu0 0.0
      %558 = vmatmul.mubr.f32.gmra.mrb[0].mxu0 %v426
      %v559 = vpop.f32.mrb[0].mxu0
      %v560 = vadd.f32 0.0, %v559
      %v561 = vpop.f32.mrb[0].mxu0
      %562 = vmatprep.mubr.f32.mxu0 0.0
      %563 = vmatmul.mubr.f32.gmra.mrb[0].mxu0 %v429
      %v564 = vpop.f32.mrb[0].mxu0
      %v565 = vadd.f32 0.0, %v564
      %v566 = vpop.f32.mrb[0].mxu0
      %567 = vmatprep.mubr.f32.mxu0 0.0
      %568 = vmatmul.mubr.f32.gmra.mrb[0].mxu0 %v432
      %v569 = vpop.f32.mrb[0].mxu0
      %v570 = vadd.f32 0.0, %v569
      %v571 = vpop.f32.mrb[0].mxu0
      %572 = vmatprep.mubr.f32.mxu0 0.0
      %573 = vmatmul.mubr.f32.gmra.mrb[0].mxu0 %v435
      %v574 = vpop.f32.mrb[0].mxu0
      %v575 = vadd.f32 0.0, %v574
      %v576 = vpop.f32.mrb[0].mxu0
      %577 = vmatprep.mubr.f32.mxu0 0.0
      %578 = vmatmul.mubr.f32.gmra.mrb[0].mxu0 %v438
      %v579 = vpop.f32.mrb[0].mxu0
      %v580 = vadd.f32 0.0, %v579
      %v581 = vpop.f32.mrb[0].mxu0
      %582 = vmatprep.mubr.f32.mxu0 0.0
      %583 = vmatmul.mubr.f32.gmra.mrb[0].mxu0 %v441
      %v584 = vpop.f32.mrb[0].mxu0
      %v585 = vadd.f32 0.0, %v584
      %v586 = vpop.f32.mrb[0].mxu0
      %587 = vdwg.mxu0
      %vm588 = vcmask 261120
      %589 = vst.msk [vmem:[%s172] sm:$0xff] %vm588, %v510
      %590 = vst.msk [vmem:[%s172 + $0x8] sm:$0xff] %vm588, %v515
      %591 = vst.msk [vmem:[%s172 + $0x10] sm:$0xff] %vm588, %v520
      %592 = vst.msk [vmem:[%s172 + $0x18] sm:$0xff] %vm588, %v525
      %593 = vst.msk [vmem:[%s172 + $0x20] sm:$0xff] %vm588, %v530
      %594 = vst.msk [vmem:[%s172 + $0x28] sm:$0xff] %vm588, %v535
      %595 = vst.msk [vmem:[%s172 + $0x30] sm:$0xff] %vm588, %v540
      %596 = vst.msk [vmem:[%s172 + $0x38] sm:$0xff] %vm588, %v545
      %597 = vst.msk [vmem:[%s172 + $0x40] sm:$0xff] %vm588, %v550
      %598 = vst.msk [vmem:[%s172 + $0x48] sm:$0xff] %vm588, %v555
      %599 = vst.msk [vmem:[%s172 + $0x50] sm:$0xff] %vm588, %v560
      %600 = vst.msk [vmem:[%s172 + $0x58] sm:$0xff] %vm588, %v565
      %601 = vst.msk [vmem:[%s172 + $0x60] sm:$0xff] %vm588, %v570
      %602 = vst.msk [vmem:[%s172 + $0x68] sm:$0xff] %vm588, %v575
      %603 = vst.msk [vmem:[%s172 + $0x70] sm:$0xff] %vm588, %v580
      %604 = vst.msk [vmem:[%s172 + $0x78] sm:$0xff] %vm588, %v585
      %s605 = smul.u32 16, %s14
      %p606 = scmp.lt.s32.totalorder %s605, 31
      %s607 = scalar_select %p606, %s605, 31
      %s608 = smul.addr %s607, 8
      %s609 = scalar_lea.vmem %s3, %s608
      // Predicated region
      $region33: #{tpu_custom_call.1} parent=31 // pred_check
        %p610 = pneg %p100
      $region34: #{tpu_custom_call.1} parent=31 // pred_check_branch
        %612 = sbr.rel (%p610) target = $region36
      $region35: #{tpu_custom_call.1} parent=31 // pred_region
        %s613 = smul.u32 16, %s14
      $region36: #{tpu_custom_call.1} parent=31 // pred_fallthru
        _
    $region32: #{tpu_custom_call.1} parent=5 // pred_fallthru
      _
    %p614 = scmp.le.s32.totalorder 2, %s9
    // Predicated region
    $region37: #{tpu_custom_call.1} parent=5 // pred_check
      %p615 = pneg %p614
    $region38: #{tpu_custom_call.1} parent=5 // pred_check_branch
      %617 = sbr.rel (%p615) target = $region40
    $region39: #{tpu_custom_call.1} parent=5 // pred_region
      %s618 = ssub.s32 %s9, 2
      // Predicated region
      $region41: #{tpu_custom_call.1} parent=39 // pred_check
        %p619 = pneg %p106
      $region42: #{tpu_custom_call.1} parent=39 // pred_check_branch
        %621 = sbr.rel (%p619) target = $region44
      $region43: #{tpu_custom_call.1} parent=39 // pred_region
        %s622 = smul.u32 16, %s15
        %p623 = scmp.lt.s32.totalorder %s622, 31
        %s624 = scalar_select %p623, %s622, 31
        %s625 = smul.addr %s624, 8
        %s626 = scalar_lea.vmem %s3, %s625
      $region44: #{tpu_custom_call.1} parent=39 // pred_fallthru
        _
    $region40: #{tpu_custom_call.1} parent=5 // pred_fallthru
      _
  $region6: #{tpu_custom_call.1} parent=0 // loop_footer
    %s13 = sadd.s32 1, %s9
  $region7: #{tpu_custom_call.1} parent=0 // loop_footer_branch
    %8 = sbr.rel target = $region3
  $region8: #{tpu_custom_call.1} parent=0 // loop_exit
    _

</llo_original>
